<compile_context>
chip_gen: v7x
topology: tpu7x:2x2x1
jax: 0.10.0
libtpu: 0.0.40
codegen_flags: <defaults>
</compile_context>

<pallas_src>
import jax
import jax.numpy as jnp
from jax import lax
from jax.experimental import pallas as pl
from jax.experimental.pallas import tpu as pltpu


def _round_up(x, m):
    return (x + m - 1) // m * m


def _budget_and_limit():
    """Return (vmem_working_set_budget, vmem_limit_bytes_or_None, two_tensorcores)."""
    try:
        cap = int(pltpu.get_tpu_info().vmem_capacity_bytes)
    except Exception:
        # Unknown chip: stay within every generation's default scoped VMEM limit
        # and skip the multi-core grid split.
        return 12 * 1024 * 1024, None, False
    if cap <= 64 * 1024 * 1024:
        # v7x: 64 MiB VMEM per TensorCore, 2 TensorCores per chip.
        return 16 * 1024 * 1024, 40 * 1024 * 1024, True
    # v5e / v6e: 128 MiB VMEM, single TensorCore.
    return 48 * 1024 * 1024, 96 * 1024 * 1024, False


def _l2_normalize_kernel(x_ref, o_ref):
    # Block: (tm, D).  Per-row reduction over the lane axis; f32 accumulation for
    # the sum of squares, scale-multiply kept in the input dtype.
    x = x_ref[...]
    xf = x.astype(jnp.float32)
    sumsq = jnp.sum(xf * xf, axis=-1, keepdims=True)
    inv = lax.rsqrt(sumsq)                       # EUP slot -> effectively free here
    o_ref[...] = x * inv.astype(x.dtype)


def _choose_row_tile(N, D, itemsize, working_set_budget, two_cores):
    # Sublane alignment: 8 rows for 32-bit, 16 for bf16 (packed sublanes).
    row_align = max(8, 32 // itemsize)
    # VMEM tiles are physically padded to 128 lanes regardless of logical D.
    d_lanes = _round_up(D, 128)
    # Working set per grid step: (in + out) x 2 pipeline buffers.
    bytes_per_row = 4 * d_lanes * itemsize
    tm = max(row_align, (working_set_budget // bytes_per_row) // row_align * row_align)
    # Never bigger than the (sublane-aligned) problem; no fixed row cap so
    # narrow-D inputs still get large DMA tiles.
    tm = min(tm, _round_up(N, row_align))
    tm = max(tm, row_align)
    if two_cores:
        # v7x only: keep >= 4 grid steps so both TensorCores get work under
        # dimension_semantics=("parallel",).  On 1-TC chips the split only adds
        # per-step overhead, so it is skipped.
        while tm > row_align and pl.cdiv(N, tm) < 4 and N > 4 * row_align:
            tm = max(row_align, (tm // 2) // row_align * row_align)
    return tm


def l2_normalize(x):
    """Row-wise L2 normalization of x with shape (N, D): x / sqrt(sum(x**2, axis=1))."""
    N, D = x.shape
    itemsize = jnp.dtype(x.dtype).itemsize
    working, limit, two_cores = _budget_and_limit()
    tm = _choose_row_tile(N, D, itemsize, working, two_cores)

    cp_kwargs = dict(dimension_semantics=("parallel",))
    if limit is not None:
        cp_kwargs["vmem_limit_bytes"] = limit

    return pl.pallas_call(
        _l2_normalize_kernel,
        out_shape=jax.ShapeDtypeStruct((N, D), x.dtype),
        grid_spec=pltpu.PrefetchScalarGridSpec(
            num_scalar_prefetch=0,
            grid=(pl.cdiv(N, tm),),
            in_specs=[pl.BlockSpec((tm, D), lambda i: (i, 0))],
            out_specs=pl.BlockSpec((tm, D), lambda i: (i, 0)),
        ),
        compiler_params=pltpu.CompilerParams(**cp_kwargs),
    )(x)


# TODO(synk): the CLIP visual/text transformer backbones, BatchNorm1d bottleneck,
# prompt learner / text encoder and the cross/fusion attention blocks of build_model
# depend on pretrained CLIP weights and are not re-implemented here; this kernel
# covers the custom eval-path math (Normalize(2)).  For the canonical (batch, 2048)
# eval shape, the ideal deployment is to fuse this normalization into the epilogue
# of the kernel producing `feat` (bottleneck BN) rather than a standalone launch.


def _reference(x):
    xf = x.astype(jnp.float32)
    n = jnp.sqrt(jnp.sum(xf * xf, axis=1, keepdims=True))
    return (xf / n).astype(x.dtype)


if __name__ == "__main__":
    key = jax.random.PRNGKey(0)
    k1, k2, k3, k4 = jax.random.split(key, 4)

    # Canonical build_model eval shape: feat = bottleneck(x_pool), pool_dim = 2048.
    feat = jax.random.normal(k1, (16, 2048), dtype=jnp.float32)
    out = jax.block_until_ready(l2_normalize(feat))
    ref = _reference(feat)
    assert out.shape == feat.shape and out.dtype == feat.dtype
    assert jnp.allclose(out, ref, atol=1e-5, rtol=1e-5)

    # Non-lane-aligned D: block D dim == full array dim, no HBM padding.
    x_small = jax.random.normal(k2, (8, 32), dtype=jnp.float32)
    out_small = jax.block_until_ready(l2_normalize(x_small))
    assert out_small.shape == x_small.shape and out_small.dtype == x_small.dtype
    assert jnp.allclose(out_small, _reference(x_small), atol=1e-5, rtol=1e-5)

    # Non-tile-aligned N: partial last block handled by Pallas masking (no pad/slice).
    x_ragged = jax.random.normal(k3, (13, 384), dtype=jnp.float32)
    out_ragged = jax.block_until_ready(l2_normalize(x_ragged))
    assert out_ragged.shape == x_ragged.shape
    assert jnp.allclose(out_ragged, _reference(x_ragged), atol=1e-5, rtol=1e-5)

    # bf16 path: f32 accumulation for the sum-of-squares, bf16 scale multiply.
    x_bf16 = jax.random.normal(k4, (16, 2048), dtype=jnp.bfloat16)
    out_bf16 = jax.block_until_ready(l2_normalize(x_bf16))
    ref_bf16 = _reference(x_bf16)
    assert out_bf16.shape == x_bf16.shape and out_bf16.dtype == jnp.bfloat16
    assert jnp.allclose(out_bf16.astype(jnp.float32), ref_bf16.astype(jnp.float32),
                        atol=2e-2, rtol=2e-2)

    print("KERNEL_OK")
</pallas_src>

<mosaic_0001>
module attributes {stable_mosaic.version = 11 : i64} {
  func.func @_l2_normalize_kernel(%arg0: i32, %arg1: memref<16x2048xf32, #tpu.memory_space<vmem>>, %arg2: memref<16x2048xf32, #tpu.memory_space<vmem>>) attributes {dimension_semantics = [#tpu.dimension_semantics<parallel>], iteration_bounds = array<i64: 1>, scalar_prefetch = 0 : i64, scratch_operands = 0 : i64, tpu.core_type = #tpu.core_type<tc>, window_params = [{transform_indices = @transform_0, window_bounds = array<i64: 16, 2048>}, {transform_indices = @transform_1, window_bounds = array<i64: 16, 2048>}]} {
    %c0 = arith.constant 0 : index
    %c0_0 = arith.constant 0 : index
    %0 = vector.load %arg1[%c0, %c0_0] : memref<16x2048xf32, #tpu.memory_space<vmem>>, vector<16x2048xf32>
    %1 = arith.mulf %0, %0 : vector<16x2048xf32>
    %cst = arith.constant dense<0.000000e+00> : vector<16xf32>
    %2 = vector.multi_reduction <add>, %1, %cst [1] : vector<16x2048xf32> to vector<16xf32>
    %3 = vector.shape_cast %2 : vector<16xf32> to vector<16x1xf32>
    %4 = math.rsqrt %3 : vector<16x1xf32>
    %5 = vector.broadcast %4 : vector<16x1xf32> to vector<16x2048xf32>
    %6 = arith.mulf %0, %5 : vector<16x2048xf32>
    %c0_1 = arith.constant 0 : index
    %c0_2 = arith.constant 0 : index
    %7 = vector.load %arg2[%c0_1, %c0_2] : memref<16x2048xf32, #tpu.memory_space<vmem>>, vector<16x2048xf32>
    tpu.vector_store %arg2[%c0_1, %c0_2], %6 {strides = array<i32>} : memref<16x2048xf32, #tpu.memory_space<vmem>>, vector<16x2048xf32>,
    return
  }
  func.func @transform_0(%arg0: i32) -> (i32, i32) {
    %c0_i32 = arith.constant 0 : i32
    %c0_i32_0 = arith.constant 0 : i32
    return %arg0, %c0_i32 : i32, i32
  }
  func.func @transform_1(%arg0: i32) -> (i32, i32) {
    %c0_i32 = arith.constant 0 : i32
    %c0_i32_0 = arith.constant 0 : i32
    return %arg0, %c0_i32 : i32, i32
  }
}

</mosaic_0001>

<llo_original>
// kernel: tpu_custom_call.1
$region0: #{tpu_custom_call.1}
  #allocation0 [shape = 'u32[]', space=smem, size = 0x4, offset = 0x4, fixed_abs, tag = 'smem constant byte address 0x4 - core index']
  #allocation1 [shape = 'u32[144,128]{1,0:T(1,128)}', space=vmem, size = 0x12000, scoped, tag = 'internal scratch']
  %s0 = inlined_call_operand.hbm [shape: f32[16,2048], index: 0, kind: input, shape index: {}]
  %s1 = inlined_call_operand.hbm [shape: f32[16,2048], index: 1, kind: output, shape index: {}]
  %s2 = sld [smem:[#allocation0]]
  $region18: #{tpu_custom_call.1} parent=0
    _
  %s4 = ssub.s32 1, %s2
  %s5 = scalar_select 0, %s4, %s2
  $region1: #{tpu_custom_call.1} parent=0
    #allocation2 [shape = 'u8[131072]{0}', space=vmem, size = 0x20000, scoped, tag = 'input window, operand 0, single buffered']
    #allocation3 [shape = 's32[1]{0}', space=sflag, size = 0x4, scoped, tag = 'scoped memory for tpu_custom_call.1']
    #allocation4 [shape = 's32[1]{0}', space=sflag, size = 0x4, scoped, tag = 'scoped memory for tpu_custom_call.1']
    #allocation5 [shape = 'u8[131072]{0}', space=vmem, size = 0x20000, scoped, tag = 'output window, operand 0, single buffered']
    %6 = vsyncpa [#allocation3], 0
    %7 = vsyncpa [#allocation4], 0
    // Predicated region
    $region2: #{tpu_custom_call.1} parent=1 // pred_check
      _
    $region3: #{tpu_custom_call.1} parent=1 // pred_check_branch
      %9 = sbr.rel (0) target = $region5
    $region4: #{tpu_custom_call.1} parent=1 // pred_region
      %s11 = ssub.s32 4096, 4096
      %12 = vsyncadd [#allocation3], %s11
      %s13 = sshll.u32 [#allocation2], 4
      %s14 = int_to_ptr.vmem [resolvable:$true] %s13
      %19 = dma.hbm_to_vmem [thread:$0]  %s0, 4096, %s14, [#allocation3], 2048, 2048, 128
    $region5: #{tpu_custom_call.1} parent=1 // pred_fallthru
      _
    // Predicated region
    $region6: #{tpu_custom_call.1} parent=1 // pred_check
      _
    $region7: #{tpu_custom_call.1} parent=1 // pred_check_branch
      %21 = sbr.rel (0) target = $region9
    $region8: #{tpu_custom_call.1} parent=1 // pred_region
      %22 = dma.done [#allocation3], 4096
    $region9: #{tpu_custom_call.1} parent=1 // pred_fallthru
      _
    %v23 = vld [vmem:[#allocation2] sm:$0xff]
    %v24 = vld [vmem:[#allocation2 + $0x8] sm:$0xff]
    %v25 = vld [vmem:[#allocation2 + $0x10] sm:$0xff]
    %v26 = vld [vmem:[#allocation2 + $0x18] sm:$0xff]
    %v27 = vld [vmem:[#allocation2 + $0x20] sm:$0xff]
    %v28 = vld [vmem:[#allocation2 + $0x28] sm:$0xff]
    %v29 = vld [vmem:[#allocation2 + $0x30] sm:$0xff]
    %v30 = vld [vmem:[#allocation2 + $0x38] sm:$0xff]
    %v31 = vld [vmem:[#allocation2 + $0x40] sm:$0xff]
    %v32 = vld [vmem:[#allocation2 + $0x48] sm:$0xff]
    %v33 = vld [vmem:[#allocation2 + $0x50] sm:$0xff]
    %v34 = vld [vmem:[#allocation2 + $0x58] sm:$0xff]
    %v35 = vld [vmem:[#allocation2 + $0x60] sm:$0xff]
    %v36 = vld [vmem:[#allocation2 + $0x68] sm:$0xff]
    %v37 = vld [vmem:[#allocation2 + $0x70] sm:$0xff]
    %v38 = vld [vmem:[#allocation2 + $0x78] sm:$0xff]
    %v39 = vld [vmem:[#allocation2 + $0x80] sm:$0xff]
    %v40 = vld [vmem:[#allocation2 + $0x88] sm:$0xff]
    %v41 = vld [vmem:[#allocation2 + $0x90] sm:$0xff]
    %v42 = vld [vmem:[#allocation2 + $0x98] sm:$0xff]
    %v43 = vld [vmem:[#allocation2 + $0xa0] sm:$0xff]
    %v44 = vld [vmem:[#allocation2 + $0xa8] sm:$0xff]
    %v45 = vld [vmem:[#allocation2 + $0xb0] sm:$0xff]
    %v46 = vld [vmem:[#allocation2 + $0xb8] sm:$0xff]
    %v47 = vld [vmem:[#allocation2 + $0xc0] sm:$0xff]
    %v48 = vld [vmem:[#allocation2 + $0xc8] sm:$0xff]
    %v49 = vld [vmem:[#allocation2 + $0xd0] sm:$0xff]
    %v50 = vld [vmem:[#allocation2 + $0xd8] sm:$0xff]
    %v51 = vld [vmem:[#allocation2 + $0xe0] sm:$0xff]
    %v52 = vld [vmem:[#allocation2 + $0xe8] sm:$0xff]
    %v53 = vld [vmem:[#allocation2 + $0xf0] sm:$0xff]
    %v54 = vld [vmem:[#allocation2 + $0xf8] sm:$0xff]
    %v55 = vmul.f32 %v23, %v23
    %v56 = vmul.f32 %v24, %v24
    %v57 = vmul.f32 %v25, %v25
    %v58 = vmul.f32 %v26, %v26
    %v59 = vmul.f32 %v27, %v27
    %v60 = vmul.f32 %v28, %v28
    %v61 = vmul.f32 %v29, %v29
    %v62 = vmul.f32 %v30, %v30
    %v63 = vmul.f32 %v31, %v31
    %v64 = vmul.f32 %v32, %v32
    %v65 = vmul.f32 %v33, %v33
    %v66 = vmul.f32 %v34, %v34
    %v67 = vmul.f32 %v35, %v35
    %v68 = vmul.f32 %v36, %v36
    %v69 = vmul.f32 %v37, %v37
    %v70 = vmul.f32 %v38, %v38
    %v71 = vmul.f32 %v39, %v39
    %v72 = vmul.f32 %v40, %v40
    %v73 = vmul.f32 %v41, %v41
    %v74 = vmul.f32 %v42, %v42
    %v75 = vmul.f32 %v43, %v43
    %v76 = vmul.f32 %v44, %v44
    %v77 = vmul.f32 %v45, %v45
    %v78 = vmul.f32 %v46, %v46
    %v79 = vmul.f32 %v47, %v47
    %v80 = vmul.f32 %v48, %v48
    %v81 = vmul.f32 %v49, %v49
    %v82 = vmul.f32 %v50, %v50
    %v83 = vmul.f32 %v51, %v51
    %v84 = vmul.f32 %v52, %v52
    %v85 = vmul.f32 %v53, %v53
    %v86 = vmul.f32 %v54, %v54
    %v87 = vadd.f32 %v55, %v56
    %v88 = vadd.f32 %v87, %v57
    %v89 = vadd.f32 %v88, %v58
    %v90 = vadd.f32 %v89, %v59
    %v91 = vadd.f32 %v90, %v60
    %v92 = vadd.f32 %v91, %v61
    %v93 = vadd.f32 %v92, %v62
    %v94 = vadd.f32 %v93, %v63
    %v95 = vadd.f32 %v94, %v64
    %v96 = vadd.f32 %v95, %v65
    %v97 = vadd.f32 %v96, %v66
    %v98 = vadd.f32 %v97, %v67
    %v99 = vadd.f32 %v98, %v68
    %v100 = vadd.f32 %v99, %v69
    %v101 = vadd.f32 %v100, %v70
    %102 = vadd.xlane.f32.xlu0 %v101
    %v103 = vpop.xlane.xlu0 %102
    %v104 = vadd.f32 %v71, %v72
    %v105 = vadd.f32 %v104, %v73
    %v106 = vadd.f32 %v105, %v74
    %v107 = vadd.f32 %v106, %v75
    %v108 = vadd.f32 %v107, %v76
    %v109 = vadd.f32 %v108, %v77
    %v110 = vadd.f32 %v109, %v78
    %v111 = vadd.f32 %v110, %v79
    %v112 = vadd.f32 %v111, %v80
    %v113 = vadd.f32 %v112, %v81
    %v114 = vadd.f32 %v113, %v82
    %v115 = vadd.f32 %v114, %v83
    %v116 = vadd.f32 %v115, %v84
    %v117 = vadd.f32 %v116, %v85
    %v118 = vadd.f32 %v117, %v86
    %119 = vadd.xlane.f32.xlu0 %v118
    %v120 = vpop.xlane.xlu0 %119
    %v121 = vrsqrt.pop %v103
    %v122 = vrsqrt.pop %v120
    %v123 = vmul.f32 %v23, %v121
    %v124 = vmul.f32 %v24, %v121
    %v125 = vmul.f32 %v25, %v121
    %v126 = vmul.f32 %v26, %v121
    %v127 = vmul.f32 %v27, %v121
    %v128 = vmul.f32 %v28, %v121
    %v129 = vmul.f32 %v29, %v121
    %v130 = vmul.f32 %v30, %v121
    %v131 = vmul.f32 %v31, %v121
    %v132 = vmul.f32 %v32, %v121
    %v133 = vmul.f32 %v33, %v121
    %v134 = vmul.f32 %v34, %v121
    %v135 = vmul.f32 %v35, %v121
    %v136 = vmul.f32 %v36, %v121
    %v137 = vmul.f32 %v37, %v121
    %v138 = vmul.f32 %v38, %v121
    %v139 = vmul.f32 %v39, %v122
    %v140 = vmul.f32 %v40, %v122
    %v141 = vmul.f32 %v41, %v122
    %v142 = vmul.f32 %v42, %v122
    %v143 = vmul.f32 %v43, %v122
    %v144 = vmul.f32 %v44, %v122
    %v145 = vmul.f32 %v45, %v122
    %v146 = vmul.f32 %v46, %v122
    %v147 = vmul.f32 %v47, %v122
    %v148 = vmul.f32 %v48, %v122
    %v149 = vmul.f32 %v49, %v122
    %v150 = vmul.f32 %v50, %v122
    %v151 = vmul.f32 %v51, %v122
    %v152 = vmul.f32 %v52, %v122
    %v153 = vmul.f32 %v53, %v122
    %v154 = vmul.f32 %v54, %v122
    %155 = vst [vmem:[#allocation5] sm:$0xff] %v123
    %156 = vst [vmem:[#allocation5 + $0x8] sm:$0xff] %v124
    %157 = vst [vmem:[#allocation5 + $0x10] sm:$0xff] %v125
    %158 = vst [vmem:[#allocation5 + $0x18] sm:$0xff] %v126
    %159 = vst [vmem:[#allocation5 + $0x20] sm:$0xff] %v127
    %160 = vst [vmem:[#allocation5 + $0x28] sm:$0xff] %v128
    %161 = vst [vmem:[#allocation5 + $0x30] sm:$0xff] %v129
    %162 = vst [vmem:[#allocation5 + $0x38] sm:$0xff] %v130
    %163 = vst [vmem:[#allocation5 + $0x40] sm:$0xff] %v131
    %164 = vst [vmem:[#allocation5 + $0x48] sm:$0xff] %v132
    %165 = vst [vmem:[#allocation5 + $0x50] sm:$0xff] %v133
    %166 = vst [vmem:[#allocation5 + $0x58] sm:$0xff] %v134
    %167 = vst [vmem:[#allocation5 + $0x60] sm:$0xff] %v135
    %168 = vst [vmem:[#allocation5 + $0x68] sm:$0xff] %v136
    %169 = vst [vmem:[#allocation5 + $0x70] sm:$0xff] %v137
    %170 = vst [vmem:[#allocation5 + $0x78] sm:$0xff] %v138
    %171 = vst [vmem:[#allocation5 + $0x80] sm:$0xff] %v139
    %172 = vst [vmem:[#allocation5 + $0x88] sm:$0xff] %v140
    %173 = vst [vmem:[#allocation5 + $0x90] sm:$0xff] %v141
    %174 = vst [vmem:[#allocation5 + $0x98] sm:$0xff] %v142
    %175 = vst [vmem:[#allocation5 + $0xa0] sm:$0xff] %v143
    %176 = vst [vmem:[#allocation5 + $0xa8] sm:$0xff] %v144
    %177 = vst [vmem:[#allocation5 + $0xb0] sm:$0xff] %v145
    %178 = vst [vmem:[#allocation5 + $0xb8] sm:$0xff] %v146
    %179 = vst [vmem:[#allocation5 + $0xc0] sm:$0xff] %v147
    %180 = vst [vmem:[#allocation5 + $0xc8] sm:$0xff] %v148
    %181 = vst [vmem:[#allocation5 + $0xd0] sm:$0xff] %v149
    %182 = vst [vmem:[#allocation5 + $0xd8] sm:$0xff] %v150
    %183 = vst [vmem:[#allocation5 + $0xe0] sm:$0xff] %v151
    %184 = vst [vmem:[#allocation5 + $0xe8] sm:$0xff] %v152
    %185 = vst [vmem:[#allocation5 + $0xf0] sm:$0xff] %v153
    %186 = vst [vmem:[#allocation5 + $0xf8] sm:$0xff] %v154
    // Predicated region
    $region10: #{tpu_custom_call.1} parent=1 // pred_check
      _
    $region11: #{tpu_custom_call.1} parent=1 // pred_check_branch
      %188 = sbr.rel (0) target = $region13
    $region12: #{tpu_custom_call.1} parent=1 // pred_region
      %s190 = ssub.s32 4096, 4096
      %191 = vsyncadd [#allocation4], %s190
      %s192 = sshll.u32 [#allocation5], 4
      %s193 = int_to_ptr.vmem [resolvable:$true] %s192
      %198 = dma.vmem_to_hbm [thread:$0]  %s193, 4096, %s1, [#allocation4], 2048, 2048, 128
    $region13: #{tpu_custom_call.1} parent=1 // pred_fallthru
      _
    // Predicated region
    $region14: #{tpu_custom_call.1} parent=1 // pred_check
      _
    $region15: #{tpu_custom_call.1} parent=1 // pred_check_branch
      %200 = sbr.rel (0) target = $region17
    $region16: #{tpu_custom_call.1} parent=1 // pred_region
      %201 = dma.done [#allocation4], 4096
    $region17: #{tpu_custom_call.1} parent=1 // pred_fallthru
      _
    %202 = vsyncpa [#allocation3], 1
    %203 = vsyncpa [#allocation4], 1

</llo_original>
